<compile_context>
chip_gen: v6e
topology: v6e:2x2x1
jax: 0.10.0
libtpu: 0.0.40
codegen_flags: <defaults>
</compile_context>

<pallas_src>
import functools

import jax
import jax.numpy as jnp
from jax.experimental import pallas as pl
from jax.experimental.pallas import tpu as pltpu

_LANE = 128


def _log_softmax_kernel(x_ref, o_ref):
    # x_ref / o_ref: (tT, Vp) tile; reduction runs over the lane axis Vp.
    x = x_ref[...].astype(jnp.float32)
    m = jnp.max(x, axis=-1, keepdims=True)
    shifted = x - m
    p = jnp.exp(shifted)                                  # one exp / element
    lse = jnp.log(jnp.sum(p, axis=-1, keepdims=True))     # one log / row
    o_ref[...] = (shifted - lse).astype(o_ref.dtype)


def _choose_tile_t(T, Vp, itemsize, sublane, target_block_bytes):
    """Largest multiple of `sublane` that divides T and keeps a block ~target."""
    if T <= sublane:
        return T
    max_rows = max(sublane, target_block_bytes // max(1, Vp * itemsize))
    tT = min(T, (max_rows // sublane) * sublane)
    tT = max(tT, sublane)
    while tT > sublane and T % tT != 0:
        tT -= sublane
    if T % tT != 0:           # T not a multiple of the sublane count: one block
        tT = T
    return tT


@functools.partial(jax.jit, static_argnames=("target_block_bytes",))
def head_forward(x, *, target_block_bytes=1 << 20):
    """log_softmax along dim=2 of a (B, T, V) array, computed in Pallas."""
    B, T, V = x.shape
    dtype = x.dtype
    itemsize = jnp.dtype(dtype).itemsize
    sublane = max(8, 32 // itemsize)          # 8 (f32) / 16 (bf16) / 32 (8-bit)

    # Lane-dense last dim: pad V up to a multiple of 128 with -inf so stores
    # are full-width and the pad lanes are inert in both the max and the sum.
    Vp = ((V + _LANE - 1) // _LANE) * _LANE
    xp = x
    if Vp != V:
        xp = jnp.pad(x, ((0, 0), (0, 0), (0, Vp - V)),
                     constant_values=float("-inf"))

    tT = _choose_tile_t(T, Vp, itemsize, sublane, target_block_bytes)
    grid = (B, T // tT)

    # `None` squeezes the batch dim out of the kernel view (== pl.Squeezed()).
    block = (None, tT, Vp)

    out = pl.pallas_call(
        _log_softmax_kernel,
        out_shape=jax.ShapeDtypeStruct((B, T, Vp), dtype),
        grid_spec=pltpu.PrefetchScalarGridSpec(
            num_scalar_prefetch=0,
            grid=grid,
            in_specs=[pl.BlockSpec(block, lambda b, t: (b, t, 0))],
            out_specs=pl.BlockSpec(block, lambda b, t: (b, t, 0)),
        ),
        compiler_params=pltpu.CompilerParams(
            dimension_semantics=("parallel", "parallel"),
        ),
        cost_estimate=pl.CostEstimate(
            flops=5 * B * T * Vp,
            transcendentals=B * T * Vp,
            bytes_accessed=2 * B * T * Vp * itemsize,
        ),
    )(xp)

    if Vp != V:
        out = out[..., :V]
    return out


if __name__ == "__main__":
    key = jax.random.PRNGKey(0)

    # Small shapes consistent with a (B, T, V) head; V=32 exercises the
    # lane-dense (-inf) padding path.
    B, T, V = 2, 8, 32
    x = jax.random.normal(key, (B, T, V), dtype=jnp.float32)
    out = jax.block_until_ready(head_forward(x))
    ref = jax.nn.log_softmax(x, axis=2)
    assert out.shape == (B, T, V)
    assert jnp.allclose(out, ref, atol=1e-5, rtol=1e-5)

    # Second small check: lane-aligned V (no padding) and a tiled T axis.
    key2 = jax.random.PRNGKey(1)
    x2 = jax.random.normal(key2, (2, 16, 256), dtype=jnp.float32)
    out2 = jax.block_until_ready(head_forward(x2, target_block_bytes=8 * 1024))
    ref2 = jax.nn.log_softmax(x2, axis=2)
    assert jnp.allclose(out2, ref2, atol=1e-5, rtol=1e-5)

    print("KERNEL_OK")
</pallas_src>

<mosaic_0001>
module attributes {stable_mosaic.version = 11 : i64} {
  func.func @_log_softmax_kernel(%arg0: i32, %arg1: i32, %arg2: memref<1x8x128xf32, #tpu.memory_space<vmem>>, %arg3: memref<1x8x128xf32, #tpu.memory_space<vmem>>) attributes {dimension_semantics = [#tpu.dimension_semantics<parallel>, #tpu.dimension_semantics<parallel>], iteration_bounds = array<i64: 2, 1>, scalar_prefetch = 0 : i64, scratch_operands = 0 : i64, tpu.core_type = #tpu.core_type<tc>, window_params = [{transform_indices = @transform_0, window_bounds = array<i64: 1, 8, 128>}, {transform_indices = @transform_1, window_bounds = array<i64: 1, 8, 128>}]} {
    %c0 = arith.constant 0 : index
    %c0_0 = arith.constant 0 : index
    %c0_1 = arith.constant 0 : index
    %0 = vector.load %arg2[%c0, %c0_0, %c0_1] : memref<1x8x128xf32, #tpu.memory_space<vmem>>, vector<1x8x128xf32>
    %1 = vector.shape_cast %0 : vector<1x8x128xf32> to vector<8x128xf32>
    %cst = arith.constant dense<0xFF800000> : vector<8xf32>
    %2 = vector.multi_reduction <maximumf>, %1, %cst [1] : vector<8x128xf32> to vector<8xf32>
    %3 = vector.shape_cast %2 : vector<8xf32> to vector<8x1xf32>
    %4 = vector.broadcast %3 : vector<8x1xf32> to vector<8x128xf32>
    %5 = arith.subf %1, %4 : vector<8x128xf32>
    %6 = math.exp %5 : vector<8x128xf32>
    %cst_2 = arith.constant dense<0.000000e+00> : vector<8xf32>
    %7 = vector.multi_reduction <add>, %6, %cst_2 [1] : vector<8x128xf32> to vector<8xf32>
    %8 = vector.shape_cast %7 : vector<8xf32> to vector<8x1xf32>
    %9 = math.log %8 : vector<8x1xf32>
    %10 = vector.broadcast %9 : vector<8x1xf32> to vector<8x128xf32>
    %11 = arith.subf %5, %10 : vector<8x128xf32>
    %c0_3 = arith.constant 0 : index
    %c0_4 = arith.constant 0 : index
    %c0_5 = arith.constant 0 : index
    %12 = vector.load %arg3[%c0_3, %c0_4, %c0_5] : memref<1x8x128xf32, #tpu.memory_space<vmem>>, vector<1x8x128xf32>
    %13 = vector.shape_cast %12 : vector<1x8x128xf32> to vector<8x128xf32>
    %14 = vector.shape_cast %11 : vector<8x128xf32> to vector<1x8x128xf32>
    tpu.vector_store %arg3[%c0_3, %c0_4, %c0_5], %14 {strides = array<i32>} : memref<1x8x128xf32, #tpu.memory_space<vmem>>, vector<1x8x128xf32>,
    return
  }
  func.func @transform_0(%arg0: i32, %arg1: i32) -> (i32, i32, i32) {
    %c0_i32 = arith.constant 0 : i32
    %c0_i32_0 = arith.constant 0 : i32
    return %arg0, %arg1, %c0_i32 : i32, i32, i32
  }
  func.func @transform_1(%arg0: i32, %arg1: i32) -> (i32, i32, i32) {
    %c0_i32 = arith.constant 0 : i32
    %c0_i32_0 = arith.constant 0 : i32
    return %arg0, %arg1, %c0_i32 : i32, i32, i32
  }
}

</mosaic_0001>

<llo_original>
// kernel: head_forward.1
$region0: #{head_forward.1}
  #allocation0 [shape = 'u32[]', space=smem, size = 0x4, offset = 0x4, fixed_abs, tag = 'smem constant byte address 0x4 - core index']
  #allocation1 [shape = 'u32[144,128]{1,0:T(1,128)}', space=vmem, size = 0x12000, scoped, tag = 'internal scratch']
  %s0 = inlined_call_operand.vmem [shape: f32[2,8,128], index: 0, kind: input, shape index: {}]
  %s1 = inlined_call_operand.hbm [shape: f32[2,8,128], index: 1, kind: output, shape index: {}]
  %s2 = sld [smem:[#allocation0]]
  $region37: #{head_forward.1} parent=0
    _
  %s4 = ssub.s32 1, %s2
  %s5 = scalar_select 0, %s4, %s2
  $region1: #{head_forward.1} parent=0
    #allocation2 [shape = 'u8[8192]{0}', space=vmem, size = 0x2000, scoped, tag = 'output window, operand 0']
    #allocation3 [shape = 's32[2]{0}', space=sflag, size = 0x8, scoped, tag = 'scoped memory for head_forward.1']
    %6 = vsyncpa [#allocation3], 0
    %s7 = scalar_lea.sflag [#allocation3], 1
    %8 = vsyncpa %s7, 0
    loop: start=0, step=1, limit=4
    $region2: #{head_forward.1} parent=1 // loop_pre_header
      _
    $region3: #{head_forward.1} parent=1 // loop_header
      %s10 = sphi 0, %s14
      %p11 = scmp.ge.s32.totalorder %s10, 4
      %s17 = sphi 0, %s29
      %s18 = sphi 0, %s25
      %s19 = sphi 0, %s17
      %s20 = sphi 0, %s18
      %s21 = sphi 0, %s19
      %s22 = sphi 0, %s20
      %s34 = sphi 0, %s36
      %s37 = sphi 0, %s34
      %s38 = sphi 0, %s37
      %s54 = sphi 0, %s38
      %s62 = sphi 0, %s64
      %s65 = sphi 0, %s62
      %s66 = sphi 0, %s65
      %s82 = sphi 0, %s66
    $region4: #{head_forward.1} parent=1 // loop_header_branch
      %13 = sbr.rel (%p11) target = $region8
    $region5: #{head_forward.1} parent=1 // loop_body
      %s15 = ssub.s32 %s10, 1
      %s16 = ssub.s32 %s10, 2
      %s23 = sadd.s32 1, %s18
      %p24 = scmp.ge.s32.totalorder %s23, 1
      %s25 = scalar_select %p24, 0, %s23
      %s26 = sadd.s32 1, %s17
      %s27 = scalar_select %p24, %s26, %s17
      %p28 = scmp.ge.s32.totalorder %s27, 2
      %s29 = scalar_select %p28, 0, %s27
      %s30 = ssub.s32 %s17, %s29
      %s31 = ssub.s32 %s18, %s25
      %s32 = sor.u32 %s30, %s31
      %p33 = scmp.eq.s32.totalorder %s32, 0
      %s35 = sadd.s32 %s34, 1
      %s36 = scalar_select %p33, %s34, %s35
      %p39 = pneg %p33
      %p40 = scmp.eq.s32.totalorder %s10, 1
      %p41 = por %p39, %p40
      %p42 = scmp.ne.s32.totalorder %s34, %s37
      %p43 = scmp.eq.s32.totalorder %s10, 0
      %p44 = por %p42, %p43
      %p45 = scmp.ne.s32.totalorder %s34, %s37
      %p46 = scmp.eq.s32.totalorder %s15, 1
      %p47 = por %p45, %p46
      %p48 = scmp.ne.s32.totalorder %s37, %s38
      %p49 = scmp.eq.s32.totalorder %s15, 0
      %p50 = por %p48, %p49
      %p51 = scmp.ne.s32.totalorder %s37, %s38
      %p52 = scmp.eq.s32.totalorder %s16, 1
      %p53 = por %p51, %p52
      %p55 = scmp.ne.s32.totalorder %s38, %s54
      %p56 = scmp.eq.s32.totalorder %s16, 0
      %p57 = por %p55, %p56
      %s58 = ssub.s32 %s17, %s29
      %s59 = ssub.s32 %s18, %s25
      %s60 = sor.u32 %s58, %s59
      %p61 = scmp.eq.s32.totalorder %s60, 0
      %s63 = sadd.s32 %s62, 1
      %s64 = scalar_select %p61, %s62, %s63
      %p67 = pneg %p61
      %p68 = scmp.eq.s32.totalorder %s10, 1
      %p69 = por %p67, %p68
      %p70 = scmp.ne.s32.totalorder %s62, %s65
      %p71 = scmp.eq.s32.totalorder %s10, 0
      %p72 = por %p70, %p71
      %p73 = scmp.ne.s32.totalorder %s62, %s65
      %p74 = scmp.eq.s32.totalorder %s15, 1
      %p75 = por %p73, %p74
      %p76 = scmp.ne.s32.totalorder %s65, %s66
      %p77 = scmp.eq.s32.totalorder %s15, 0
      %p78 = por %p76, %p77
      %p79 = scmp.ne.s32.totalorder %s65, %s66
      %p80 = scmp.eq.s32.totalorder %s16, 1
      %p81 = por %p79, %p80
      %p83 = scmp.ne.s32.totalorder %s66, %s82
      %p84 = scmp.eq.s32.totalorder %s16, 0
      %p85 = por %p83, %p84
      %p86 = scmp.le.s32.totalorder 1, %s10
      %p87 = scmp.lt.s32.totalorder %s10, 3
      %p88 = pnand %p86, %p87
      %p89 = pneg %p88
      // Predicated region
      $region9: #{head_forward.1} parent=5 // pred_check
        _
      $region10: #{head_forward.1} parent=5 // pred_check_branch
        %91 = sbr.rel (%p88) target = $region12
      $region11: #{head_forward.1} parent=5 // pred_region
        %s92 = ssub.s32 %s10, 1
      $region12: #{head_forward.1} parent=5 // pred_fallthru
        _
      %p93 = scmp.lt.s32.totalorder %s10, 2
      // Predicated region
      $region13: #{head_forward.1} parent=5 // pred_check
        %p94 = pneg %p93
      $region14: #{head_forward.1} parent=5 // pred_check_branch
        %96 = sbr.rel (%p94) target = $region16
      $region15: #{head_forward.1} parent=5 // pred_region
        // Predicated region
        $region17: #{head_forward.1} parent=15 // pred_check
          %p97 = pneg %p44
        $region18: #{head_forward.1} parent=15 // pred_check_branch
          %99 = sbr.rel (%p97) target = $region20
        $region19: #{head_forward.1} parent=15 // pred_region
          %p100 = scmp.lt.s32.totalorder %s17, 1
          %s101 = scalar_select %p100, %s17, 1
          %p102 = scmp.lt.s32.totalorder %s18, 0
          %s103 = scalar_select %p102, %s18, 0
          %s104 = sadd.s32 %s103, %s101
          %s105 = smul.addr %s104, 8
          %s106 = scalar_lea.vmem %s0, %s105
        $region20: #{head_forward.1} parent=15 // pred_fallthru
          _
      $region16: #{head_forward.1} parent=5 // pred_fallthru
        _
      %p107 = scmp.le.s32.totalorder 1, %s10
      %p108 = scmp.lt.s32.totalorder %s10, 3
      %p109 = pnand %p107, %p108
      %p110 = pneg %p109
      // Predicated region
      $region21: #{head_forward.1} parent=5 // pred_check
        _
      $region22: #{head_forward.1} parent=5 // pred_check_branch
        %112 = sbr.rel (%p109) target = $region24
      $region23: #{head_forward.1} parent=5 // pred_region
        %s113 = ssub.s32 %s10, 1
        %p114 = scmp.lt.s32.totalorder %s19, 1
        %s115 = scalar_select %p114, %s19, 1
        %p116 = scmp.lt.s32.totalorder %s20, 0
        %s117 = scalar_select %p116, %s20, 0
        %s118 = sadd.s32 %s117, %s115
        %s119 = smul.addr %s118, 8
        %s120 = scalar_lea.vmem %s0, %s119
        %p121 = pneg %p50
        %p122 = pneg %p47
        %p123 = pneg %p78
        %p124 = pneg %p75
        %s125 = sand.u32 %s65, 1
        %s126 = scalar_lea.sflag [#allocation3], %s125
        %s127 = sand.u32 %s65, 1
        %s128 = smul.addr %s127, 8
        %s129 = scalar_lea.vmem [#allocation2], %s128
        %p130 = scmp.lt.s32.totalorder %s19, 1
        %s131 = scalar_select %p130, %s19, 1
        %p132 = scmp.lt.s32.totalorder %s20, 0
        %s133 = scalar_select %p132, %s20, 0
        %s134 = sadd.s32 %s133, %s131
        %s135 = smul.addr %s134, 8
        %s136 = scalar_lea.vmem %s0, %s135
        %v137 = vld [vmem:[%s136] sm:$0xff]
        %138 = vmax.xlane.f32.xlu0 %v137
        %v139 = vpop.xlane.xlu0 %138
        %v140 = vsub.f32 %v137, %v139
        %v141 = vmul.f32 %v140, 1.442695
        %v142 = vpow.pop %v141
        %143 = vadd.xlane.f32.xlu0 %v142
        %v144 = vpop.xlane.xlu0 %143
        %v145 = vlog2.pop %v144
        %v146 = vmul.f32 %v145, 0.6931472
        %v147 = vsub.f32 %v140, %v146
        %148 = vst [vmem:[%s129] sm:$0xff] %v147
        %s149 = sand.u32 %s65, 1
        %s150 = scalar_lea.sflag [#allocation3], %s149
        %s151 = sand.u32 %s65, 1
        %s152 = smul.addr %s151, 8
        %s153 = scalar_lea.vmem [#allocation2], %s152
        // Predicated region
        $region25: #{head_forward.1} parent=23 // pred_check
          %p154 = pneg %p75
        $region26: #{head_forward.1} parent=23 // pred_check_branch
          %156 = sbr.rel (%p154) target = $region28
        $region27: #{head_forward.1} parent=23 // pred_region
          %s158 = ssub.s32 128, 128
          %159 = vsyncadd %s150, %s158
          %s160 = sadd.s32 %s20, %s19
          %s161 = smul.addr %s160, 128
          %s162 = scalar_lea.hbm %s1, %s161
          %s164 = sshll.u32 %s153, 4
          %s165 = int_to_ptr.vmem [resolvable:$true] %s164
          %167 = dma.vmem_to_hbm [thread:$0]  %s165, 128, %s162, %s150
        $region28: #{head_forward.1} parent=23 // pred_fallthru
          _
      $region24: #{head_forward.1} parent=5 // pred_fallthru
        _
      %p168 = scmp.le.s32.totalorder 2, %s10
      // Predicated region
      $region29: #{head_forward.1} parent=5 // pred_check
        %p169 = pneg %p168
      $region30: #{head_forward.1} parent=5 // pred_check_branch
        %171 = sbr.rel (%p169) target = $region32
      $region31: #{head_forward.1} parent=5 // pred_region
        %s172 = ssub.s32 %s10, 2
        // Predicated region
        $region33: #{head_forward.1} parent=31 // pred_check
          %p173 = pneg %p81
        $region34: #{head_forward.1} parent=31 // pred_check_branch
          %175 = sbr.rel (%p173) target = $region36
        $region35: #{head_forward.1} parent=31 // pred_region
          %s176 = sand.u32 %s66, 1
          %s177 = scalar_lea.sflag [#allocation3], %s176
          %s178 = sand.u32 %s66, 1
          %s179 = smul.addr %s178, 8
          %s180 = scalar_lea.vmem [#allocation2], %s179
          %181 = dma.done %s177, 128
        $region36: #{head_forward.1} parent=31 // pred_fallthru
          _
      $region32: #{head_forward.1} parent=5 // pred_fallthru
        _
    $region6: #{head_forward.1} parent=1 // loop_footer
      %s14 = sadd.s32 1, %s10
    $region7: #{head_forward.1} parent=1 // loop_footer_branch
      %9 = sbr.rel target = $region3
    $region8: #{head_forward.1} parent=1 // loop_exit
      _
    %182 = vsyncpa [#allocation3], 1
    %s183 = scalar_lea.sflag [#allocation3], 1
    %184 = vsyncpa %s183, 1

</llo_original>
